<compile_context>
chip_gen: v6e
topology: v6e:2x2x1
jax: 0.10.0
libtpu: 0.0.40
codegen_flags: <defaults>
</compile_context>

<pallas_src>
import functools

import jax
import jax.numpy as jnp
from jax import lax
from jax.experimental import pallas as pl
from jax.experimental.pallas import tpu as pltpu


def _residual_block_kernel(B, Cp, H, W,
                           x_ref, w1_ref, w2_ref, wr_ref, mask_ref, pool_ref,
                           out_ref):
    """Single-step fused body.

    Layouts (channel-first, batch folded into the lane axis):
      x_ref    : (Cp, B*H*W)                f32   zero-padded input channels
      w1_ref   : (Cp,    9*Cp + 1)          bf16  conv1 im2col weight | bias
      w2_ref   : (C_out, 9*Cp + 1)          bf16  conv2 im2col weight | bias
      wr_ref   : (C_out, Cp + 1)            bf16  residual 1x1 weight | bias
      mask_ref : (9, B*H*W)                 f32   halo / cross-image validity masks
      pool_ref : (B*H*W, B*(H/2)*(W/2))     f32   2x2 average-pool matrix
      out_ref  : (C_out, B*(H/2)*(W/2))     f32   lane-dense (last dim >= 128)
    """
    HW = H * W
    BHW = B * HW

    x = x_ref[...]                                        # (Cp, BHW) f32
    w1 = w1_ref[...]                                      # bf16
    w2 = w2_ref[...]                                      # bf16
    wrb = wr_ref[...]                                     # bf16
    pool = pool_ref[...]                                  # f32
    masks = [mask_ref[k:k + 1, :] for k in range(9)]      # (1, BHW) f32 each
    ones = jnp.ones((1, BHW), jnp.float32)                # fused-bias row

    def elu(v):
        # exp(v)-1 (vs expm1) keeps the guaranteed Mosaic lowering path; ELU is
        # continuous at 0 so the tiny abs error is not amplified.
        return jnp.where(v > 0, v, jnp.exp(v) - 1.0)

    def patches(act):
        # act: (Cp, BHW) f32 -> (9*Cp + 1, BHW) bf16 im2col block.
        # Each tap is ONE XLU lane rotate (pltpu.roll) — the XLU slot is idle here
        # — and the halo mask zeroes padding / wrap / cross-image lanes.
        taps = []
        for dy in range(3):
            for dx in range(3):
                k = dy * 3 + dx
                s = (dy - 1) * W + (dx - 1)               # want out[:, p] = act[:, p + s]
                if k == 4:                                # centre tap: no shift, no mask
                    taps.append(act)
                else:
                    t = pltpu.roll(act, shift=(-s) % BHW, axis=1)
                    taps.append(t * masks[k])
        # Cp == 8 -> every tap block starts on an 8-sublane boundary: whole-vreg
        # concat, no sublane repacking before the MXU push.
        return jnp.concatenate(taps + [ones], axis=0).astype(jnp.bfloat16)

    # conv1 + bias + ELU: one MXU push, K = 9*Cp + 1, N = B*H*W lanes.
    y = elu(jnp.dot(w1, patches(x), preferred_element_type=jnp.float32))

    # conv2 + bias + ELU: one MXU push.  (Residual intentionally NOT fused into
    # this matmul — the module applies ELU *before* adding the residual.)
    z = elu(jnp.dot(w2, patches(y), preferred_element_type=jnp.float32))

    # Residual 1x1 conv (+ bias via the ones row), added after the second ELU.
    xr = jnp.concatenate([x, ones], axis=0).astype(jnp.bfloat16)
    z = z + jnp.dot(wrb, xr, preferred_element_type=jnp.float32)

    # 2x2 average pool as one matmul; output last dim = B*Hh*Wh = 128, so the
    # store is an unmasked lane-dense vst.  Kept in f32 for exact averaging.
    out_ref[...] = jnp.dot(z, pool,
                           preferred_element_type=jnp.float32).astype(out_ref.dtype)


@jax.jit
def residual_block_forward(x_nchw, params):
    B, C_in, H, W = x_nchw.shape
    C_out = params["b2"].shape[0]
    HW, Hh, Wh = H * W, H // 2, W // 2
    BHW, BP = B * HW, B * (H // 2) * (W // 2)
    Cp = max(8, ((C_in + 7) // 8) * 8)        # pad channels -> 8-sublane alignment

    f32, bf16 = jnp.float32, jnp.bfloat16

    # ---- activations: channel-first, batch folded into the lane axis ----------
    xp = jnp.zeros((B, Cp, H, W), f32).at[:, :C_in].set(x_nchw.astype(f32))
    x_flat = jnp.transpose(xp, (1, 0, 2, 3)).reshape(Cp, BHW)           # (Cp, B*HW)

    # ---- conv weights -> im2col layout (O, [tap-major, channel-minor]) | bias --
    w1p = jnp.zeros((Cp, Cp, 3, 3), f32).at[:C_in, :C_in].set(params["w1"].astype(f32))
    b1p = jnp.zeros((Cp,), f32).at[:C_in].set(params["b1"].astype(f32))
    w1f = jnp.concatenate(
        [jnp.transpose(w1p, (0, 2, 3, 1)).reshape(Cp, 9 * Cp), b1p[:, None]],
        axis=1).astype(bf16)                                            # (Cp, 9Cp+1)

    w2p = jnp.zeros((C_out, Cp, 3, 3), f32).at[:, :C_in].set(params["w2"].astype(f32))
    w2f = jnp.concatenate(
        [jnp.transpose(w2p, (0, 2, 3, 1)).reshape(C_out, 9 * Cp),
         params["b2"].astype(f32)[:, None]], axis=1).astype(bf16)       # (C_out, 9Cp+1)

    if params.get("wr") is not None:
        wr = params["wr"][:, :, 0, 0].astype(f32)                       # (C_out, C_in)
        br = params["br"].astype(f32)
    else:                                                               # Identity residual
        assert C_in == C_out, "Identity residual requires C_in == C_out"
        wr = jnp.eye(C_out, dtype=f32)
        br = jnp.zeros((C_out,), f32)
    wrp = jnp.zeros((C_out, Cp), f32).at[:, :C_in].set(wr)
    wrb = jnp.concatenate([wrp, br[:, None]], axis=1).astype(bf16)      # (C_out, Cp+1)

    # ---- halo masks: valid (non-padding) positions for the 9 taps, tiled over B
    r = jnp.arange(HW, dtype=jnp.int32) // W
    c = jnp.arange(HW, dtype=jnp.int32) % W
    mask_img = jnp.stack([((r + dy - 1 >= 0) & (r + dy - 1 < H) &
                           (c + dx - 1 >= 0) & (c + dx - 1 < W))
                          for dy in range(3) for dx in range(3)]).astype(f32)
    masks = jnp.tile(mask_img, (1, B))                                  # (9, B*HW)

    # ---- 2x2 average-pool matrix, block-diagonal over batch -> lane-dense out --
    q = jnp.arange(BHW, dtype=jnp.int32)
    bq, rem = q // HW, q % HW
    tgt = bq * (Hh * Wh) + ((rem // W) // 2) * Wh + ((rem % W) // 2)
    pool = (tgt[:, None] == jnp.arange(BP, dtype=jnp.int32)[None, :]).astype(f32) * 0.25

    # VMEM budget check (v7x: 64 MiB/TC). Everything resident, double-buffered.
    resident = 2 * sum(int(a.size) * a.dtype.itemsize
                       for a in (x_flat, w1f, w2f, wrb, masks, pool))
    assert resident < 8 * 2 ** 20, f"re-derive tiling: resident bytes = {resident}"

    kernel = functools.partial(_residual_block_kernel, B, Cp, H, W)

    def full_spec(shape):
        return pl.BlockSpec(shape, lambda i, _n=len(shape): (0,) * _n)

    grid_spec = pltpu.PrefetchScalarGridSpec(
        num_scalar_prefetch=0,
        grid=(1,),   # whole (tiny) problem in one step: weights DMA'd once, batch
                     # already folded into the 512-lane axis. For bigger B / v7x,
                     # split batch groups over a "parallel" grid axis here.
        in_specs=[
            full_spec((Cp, BHW)),             # x (channel-first, lane-dense)
            full_spec((Cp, 9 * Cp + 1)),      # w1 | b1 (im2col)
            full_spec((C_out, 9 * Cp + 1)),   # w2 | b2 (im2col)
            full_spec((C_out, Cp + 1)),       # wr | br (1x1 residual)
            full_spec((9, BHW)),              # halo masks
            full_spec((BHW, BP)),             # avg-pool matrix
        ],
        out_specs=full_spec((C_out, BP)),
    )

    out = pl.pallas_call(
        kernel,
        out_shape=jax.ShapeDtypeStruct((C_out, BP), jnp.float32),
        grid_spec=grid_spec,
        compiler_params=pltpu.CompilerParams(dimension_semantics=("arbitrary",)),
    )(x_flat, w1f, w2f, wrb, masks, pool)

    # (C_out, B*Hh*Wh) -> NCHW (B, C_out, Hh, Wh); tiny host-side relayout.
    return jnp.transpose(out.reshape(C_out, B, Hh, Wh), (1, 0, 2, 3))


def init_params(key, c_in, c_out):
    """Deterministic synthetic parameters with PyTorch-shaped conv weights."""
    ks = jax.random.split(key, 6)

    def u(k, shape, fan_in):
        bound = 1.0 / jnp.sqrt(jnp.float32(fan_in))
        return jax.random.uniform(k, shape, jnp.float32, -bound, bound)

    return {
        "w1": u(ks[0], (c_in, c_in, 3, 3), c_in * 9),
        "b1": u(ks[1], (c_in,), c_in * 9),
        "w2": u(ks[2], (c_out, c_in, 3, 3), c_in * 9),
        "b2": u(ks[3], (c_out,), c_in * 9),
        # residual_mapping is a 1x1 conv because c_in != c_out in this test
        "wr": u(ks[4], (c_out, c_in, 1, 1), c_in),
        "br": u(ks[5], (c_out,), c_in),
    }


def _reference(x, params):
    """Pure-JAX f32 reference of the PyTorch forward (numerical sanity check)."""
    dn = ("NCHW", "OIHW", "NCHW")

    def conv(v, w, b, pad):
        o = lax.conv_general_dilated(v, w, (1, 1), ((pad, pad), (pad, pad)),
                                     dimension_numbers=dn,
                                     precision=lax.Precision.HIGHEST)
        return o + b.reshape(1, -1, 1, 1)

    def elu(v):
        return jnp.where(v > 0, v, jnp.exp(v) - 1.0)

    y = elu(conv(x, params["w1"], params["b1"], 1))
    z = elu(conv(y, params["w2"], params["b2"], 1))
    z = z + conv(x, params["wr"], params["br"], 0)
    B, C, H, W = z.shape
    return z.reshape(B, C, H // 2, 2, W // 2, 2).mean(axis=(3, 5))


if __name__ == "__main__":
    key = jax.random.PRNGKey(0)
    B, C_in, C_out, H, W = 2, 4, 8, 16, 16
    k_x, k_p = jax.random.split(key)

    x = jax.random.normal(k_x, (B, C_in, H, W), jnp.float32)
    params = init_params(k_p, C_in, C_out)

    out = jax.block_until_ready(residual_block_forward(x, params))
    assert out.shape == (B, C_out, H // 2, W // 2)
    assert bool(jnp.all(jnp.isfinite(out)))

    ref = _reference(x, params)
    err = float(jnp.max(jnp.abs(out - ref)))
    # Conv matmul operands are bf16 (f32 accumulation); pool is exact f32.
    assert err < 3e-2, f"max |kernel - reference| = {err}"
    print("KERNEL_OK")
</pallas_src>

<mosaic_0001>
module attributes {stable_mosaic.version = 11 : i64} {
  func.func @_residual_block_kernel(%arg0: i32, %arg1: memref<8x512xf32, #tpu.memory_space<vmem>>, %arg2: memref<8x73xbf16, #tpu.memory_space<vmem>>, %arg3: memref<8x73xbf16, #tpu.memory_space<vmem>>, %arg4: memref<8x9xbf16, #tpu.memory_space<vmem>>, %arg5: memref<9x512xf32, #tpu.memory_space<vmem>>, %arg6: memref<512x128xf32, #tpu.memory_space<vmem>>, %arg7: memref<8x128xf32, #tpu.memory_space<vmem>>) attributes {dimension_semantics = [#tpu.dimension_semantics<arbitrary>], iteration_bounds = array<i64: 1>, scalar_prefetch = 0 : i64, scratch_operands = 0 : i64, tpu.core_type = #tpu.core_type<tc>, window_params = [{pipeline_mode = #tpu.pipeline_mode<synchronous>, transform_indices = @transform_0, window_bounds = array<i64: 8, 512>}, {pipeline_mode = #tpu.pipeline_mode<synchronous>, transform_indices = @transform_1, window_bounds = array<i64: 8, 73>}, {pipeline_mode = #tpu.pipeline_mode<synchronous>, transform_indices = @transform_2, window_bounds = array<i64: 8, 73>}, {pipeline_mode = #tpu.pipeline_mode<synchronous>, transform_indices = @transform_3, window_bounds = array<i64: 8, 9>}, {pipeline_mode = #tpu.pipeline_mode<synchronous>, transform_indices = @transform_4, window_bounds = array<i64: 9, 512>}, {pipeline_mode = #tpu.pipeline_mode<synchronous>, transform_indices = @transform_5, window_bounds = array<i64: 512, 128>}, {pipeline_mode = #tpu.pipeline_mode<synchronous>, transform_indices = @transform_6, window_bounds = array<i64: 8, 128>}]} {
    %c0 = arith.constant 0 : index
    %c0_0 = arith.constant 0 : index
    %0 = vector.load %arg1[%c0, %c0_0] : memref<8x512xf32, #tpu.memory_space<vmem>>, vector<8x512xf32>
    %c0_1 = arith.constant 0 : index
    %c0_2 = arith.constant 0 : index
    %1 = vector.load %arg2[%c0_1, %c0_2] : memref<8x73xbf16, #tpu.memory_space<vmem>>, vector<8x73xbf16>
    %c0_3 = arith.constant 0 : index
    %c0_4 = arith.constant 0 : index
    %2 = vector.load %arg3[%c0_3, %c0_4] : memref<8x73xbf16, #tpu.memory_space<vmem>>, vector<8x73xbf16>
    %c0_5 = arith.constant 0 : index
    %c0_6 = arith.constant 0 : index
    %3 = vector.load %arg4[%c0_5, %c0_6] : memref<8x9xbf16, #tpu.memory_space<vmem>>, vector<8x9xbf16>
    %c0_7 = arith.constant 0 : index
    %c0_8 = arith.constant 0 : index
    %4 = vector.load %arg6[%c0_7, %c0_8] : memref<512x128xf32, #tpu.memory_space<vmem>>, vector<512x128xf32>
    %c0_9 = arith.constant 0 : index
    %c0_10 = arith.constant 0 : index
    %5 = vector.load %arg5[%c0_9, %c0_10] : memref<9x512xf32, #tpu.memory_space<vmem>>, vector<1x512xf32>
    %c1 = arith.constant 1 : index
    %c0_11 = arith.constant 0 : index
    %6 = vector.load %arg5[%c1, %c0_11] : memref<9x512xf32, #tpu.memory_space<vmem>>, vector<1x512xf32>
    %c2 = arith.constant 2 : index
    %c0_12 = arith.constant 0 : index
    %7 = vector.load %arg5[%c2, %c0_12] : memref<9x512xf32, #tpu.memory_space<vmem>>, vector<1x512xf32>
    %c3 = arith.constant 3 : index
    %c0_13 = arith.constant 0 : index
    %8 = vector.load %arg5[%c3, %c0_13] : memref<9x512xf32, #tpu.memory_space<vmem>>, vector<1x512xf32>
    %c5 = arith.constant 5 : index
    %c0_14 = arith.constant 0 : index
    %9 = vector.load %arg5[%c5, %c0_14] : memref<9x512xf32, #tpu.memory_space<vmem>>, vector<1x512xf32>
    %c6 = arith.constant 6 : index
    %c0_15 = arith.constant 0 : index
    %10 = vector.load %arg5[%c6, %c0_15] : memref<9x512xf32, #tpu.memory_space<vmem>>, vector<1x512xf32>
    %c7 = arith.constant 7 : index
    %c0_16 = arith.constant 0 : index
    %11 = vector.load %arg5[%c7, %c0_16] : memref<9x512xf32, #tpu.memory_space<vmem>>, vector<1x512xf32>
    %c8 = arith.constant 8 : index
    %c0_17 = arith.constant 0 : index
    %12 = vector.load %arg5[%c8, %c0_17] : memref<9x512xf32, #tpu.memory_space<vmem>>, vector<1x512xf32>
    %cst = arith.constant 1.000000e+00 : f32
    %13 = vector.broadcast %cst : f32 to vector<1x512xf32>
    %c17_i32 = arith.constant 17 : i32
    %14 = tpu.dynamic_rotate %0 by %c17_i32 dim 1 : vector<8x512xf32>, i32 -> vector<8x512xf32>
    %15 = vector.broadcast %5 : vector<1x512xf32> to vector<8x512xf32>
    %16 = arith.mulf %14, %15 : vector<8x512xf32>
    %c16_i32 = arith.constant 16 : i32
    %17 = tpu.dynamic_rotate %0 by %c16_i32 dim 1 : vector<8x512xf32>, i32 -> vector<8x512xf32>
    %18 = vector.broadcast %6 : vector<1x512xf32> to vector<8x512xf32>
    %19 = arith.mulf %17, %18 : vector<8x512xf32>
    %c15_i32 = arith.constant 15 : i32
    %20 = tpu.dynamic_rotate %0 by %c15_i32 dim 1 : vector<8x512xf32>, i32 -> vector<8x512xf32>
    %21 = vector.broadcast %7 : vector<1x512xf32> to vector<8x512xf32>
    %22 = arith.mulf %20, %21 : vector<8x512xf32>
    %c1_i32 = arith.constant 1 : i32
    %23 = tpu.dynamic_rotate %0 by %c1_i32 dim 1 : vector<8x512xf32>, i32 -> vector<8x512xf32>
    %24 = vector.broadcast %8 : vector<1x512xf32> to vector<8x512xf32>
    %25 = arith.mulf %23, %24 : vector<8x512xf32>
    %c511_i32 = arith.constant 511 : i32
    %26 = tpu.dynamic_rotate %0 by %c511_i32 dim 1 : vector<8x512xf32>, i32 -> vector<8x512xf32>
    %27 = vector.broadcast %9 : vector<1x512xf32> to vector<8x512xf32>
    %28 = arith.mulf %26, %27 : vector<8x512xf32>
    %c497_i32 = arith.constant 497 : i32
    %29 = tpu.dynamic_rotate %0 by %c497_i32 dim 1 : vector<8x512xf32>, i32 -> vector<8x512xf32>
    %30 = vector.broadcast %10 : vector<1x512xf32> to vector<8x512xf32>
    %31 = arith.mulf %29, %30 : vector<8x512xf32>
    %c496_i32 = arith.constant 496 : i32
    %32 = tpu.dynamic_rotate %0 by %c496_i32 dim 1 : vector<8x512xf32>, i32 -> vector<8x512xf32>
    %33 = vector.broadcast %11 : vector<1x512xf32> to vector<8x512xf32>
    %34 = arith.mulf %32, %33 : vector<8x512xf32>
    %c495_i32 = arith.constant 495 : i32
    %35 = tpu.dynamic_rotate %0 by %c495_i32 dim 1 : vector<8x512xf32>, i32 -> vector<8x512xf32>
    %36 = vector.broadcast %12 : vector<1x512xf32> to vector<8x512xf32>
    %37 = arith.mulf %35, %36 : vector<8x512xf32>
    %38 = tpu.concatenate %16, %19, %22, %25, %0, %28, %31, %34, %37, %13 in 0 : vector<8x512xf32>, vector<8x512xf32>, vector<8x512xf32>, vector<8x512xf32>, vector<8x512xf32>, vector<8x512xf32>, vector<8x512xf32>, vector<8x512xf32>, vector<8x512xf32>, vector<1x512xf32> -> vector<73x512xf32>
    %39 = arith.truncf %38 : vector<73x512xf32> to vector<73x512xbf16>
    %cst_18 = arith.constant dense<0.000000e+00> : vector<8x512xf32>
    %40 = tpu.matmul %1, %39, %cst_18 {dimension_numbers = #tpu.dot_dimension_numbers<[1], [0], [0], [1], [0, 0, 1, 1], [], []>} : vector<8x73xbf16>, vector<73x512xbf16>, vector<8x512xf32> -> vector<8x512xf32>
    %cst_19 = arith.constant 0.000000e+00 : f32
    %41 = vector.broadcast %cst_19 : f32 to vector<8x512xf32>
    %42 = arith.cmpf ogt, %40, %41 : vector<8x512xf32>
    %43 = math.exp %40 : vector<8x512xf32>
    %cst_20 = arith.constant 1.000000e+00 : f32
    %44 = vector.broadcast %cst_20 : f32 to vector<8x512xf32>
    %45 = arith.subf %43, %44 : vector<8x512xf32>
    %46 = arith.select %42, %40, %45 : vector<8x512xi1>, vector<8x512xf32>
    %c17_i32_21 = arith.constant 17 : i32
    %47 = tpu.dynamic_rotate %46 by %c17_i32_21 dim 1 : vector<8x512xf32>, i32 -> vector<8x512xf32>
    %48 = vector.broadcast %5 : vector<1x512xf32> to vector<8x512xf32>
    %49 = arith.mulf %47, %48 : vector<8x512xf32>
    %c16_i32_22 = arith.constant 16 : i32
    %50 = tpu.dynamic_rotate %46 by %c16_i32_22 dim 1 : vector<8x512xf32>, i32 -> vector<8x512xf32>
    %51 = vector.broadcast %6 : vector<1x512xf32> to vector<8x512xf32>
    %52 = arith.mulf %50, %51 : vector<8x512xf32>
    %c15_i32_23 = arith.constant 15 : i32
    %53 = tpu.dynamic_rotate %46 by %c15_i32_23 dim 1 : vector<8x512xf32>, i32 -> vector<8x512xf32>
    %54 = vector.broadcast %7 : vector<1x512xf32> to vector<8x512xf32>
    %55 = arith.mulf %53, %54 : vector<8x512xf32>
    %c1_i32_24 = arith.constant 1 : i32
    %56 = tpu.dynamic_rotate %46 by %c1_i32_24 dim 1 : vector<8x512xf32>, i32 -> vector<8x512xf32>
    %57 = vector.broadcast %8 : vector<1x512xf32> to vector<8x512xf32>
    %58 = arith.mulf %56, %57 : vector<8x512xf32>
    %c511_i32_25 = arith.constant 511 : i32
    %59 = tpu.dynamic_rotate %46 by %c511_i32_25 dim 1 : vector<8x512xf32>, i32 -> vector<8x512xf32>
    %60 = vector.broadcast %9 : vector<1x512xf32> to vector<8x512xf32>
    %61 = arith.mulf %59, %60 : vector<8x512xf32>
    %c497_i32_26 = arith.constant 497 : i32
    %62 = tpu.dynamic_rotate %46 by %c497_i32_26 dim 1 : vector<8x512xf32>, i32 -> vector<8x512xf32>
    %63 = vector.broadcast %10 : vector<1x512xf32> to vector<8x512xf32>
    %64 = arith.mulf %62, %63 : vector<8x512xf32>
    %c496_i32_27 = arith.constant 496 : i32
    %65 = tpu.dynamic_rotate %46 by %c496_i32_27 dim 1 : vector<8x512xf32>, i32 -> vector<8x512xf32>
    %66 = vector.broadcast %11 : vector<1x512xf32> to vector<8x512xf32>
    %67 = arith.mulf %65, %66 : vector<8x512xf32>
    %c495_i32_28 = arith.constant 495 : i32
    %68 = tpu.dynamic_rotate %46 by %c495_i32_28 dim 1 : vector<8x512xf32>, i32 -> vector<8x512xf32>
    %69 = vector.broadcast %12 : vector<1x512xf32> to vector<8x512xf32>
    %70 = arith.mulf %68, %69 : vector<8x512xf32>
    %71 = tpu.concatenate %49, %52, %55, %58, %46, %61, %64, %67, %70, %13 in 0 : vector<8x512xf32>, vector<8x512xf32>, vector<8x512xf32>, vector<8x512xf32>, vector<8x512xf32>, vector<8x512xf32>, vector<8x512xf32>, vector<8x512xf32>, vector<8x512xf32>, vector<1x512xf32> -> vector<73x512xf32>
    %72 = arith.truncf %71 : vector<73x512xf32> to vector<73x512xbf16>
    %cst_29 = arith.constant dense<0.000000e+00> : vector<8x512xf32>
    %73 = tpu.matmul %2, %72, %cst_29 {dimension_numbers = #tpu.dot_dimension_numbers<[1], [0], [0], [1], [0, 0, 1, 1], [], []>} : vector<8x73xbf16>, vector<73x512xbf16>, vector<8x512xf32> -> vector<8x512xf32>
    %cst_30 = arith.constant 0.000000e+00 : f32
    %74 = vector.broadcast %cst_30 : f32 to vector<8x512xf32>
    %75 = arith.cmpf ogt, %73, %74 : vector<8x512xf32>
    %76 = math.exp %73 : vector<8x512xf32>
    %cst_31 = arith.constant 1.000000e+00 : f32
    %77 = vector.broadcast %cst_31 : f32 to vector<8x512xf32>
    %78 = arith.subf %76, %77 : vector<8x512xf32>
    %79 = arith.select %75, %73, %78 : vector<8x512xi1>, vector<8x512xf32>
    %80 = tpu.concatenate %0, %13 in 0 : vector<8x512xf32>, vector<1x512xf32> -> vector<9x512xf32>
    %81 = arith.truncf %80 : vector<9x512xf32> to vector<9x512xbf16>
    %cst_32 = arith.constant dense<0.000000e+00> : vector<8x512xf32>
    %82 = tpu.matmul %3, %81, %cst_32 {dimension_numbers = #tpu.dot_dimension_numbers<[1], [0], [0], [1], [0, 0, 1, 1], [], []>} : vector<8x9xbf16>, vector<9x512xbf16>, vector<8x512xf32> -> vector<8x512xf32>
    %83 = arith.addf %79, %82 : vector<8x512xf32>
    %cst_33 = arith.constant dense<0.000000e+00> : vector<8x128xf32>
    %84 = tpu.matmul %83, %4, %cst_33 {dimension_numbers = #tpu.dot_dimension_numbers<[1], [0], [0], [1], [0, 0, 1, 1], [], []>} : vector<8x512xf32>, vector<512x128xf32>, vector<8x128xf32> -> vector<8x128xf32>
    %c0_34 = arith.constant 0 : index
    %c0_35 = arith.constant 0 : index
    %85 = vector.load %arg7[%c0_34, %c0_35] : memref<8x128xf32, #tpu.memory_space<vmem>>, vector<8x128xf32>
    tpu.vector_store %arg7[%c0_34, %c0_35], %84 {strides = array<i32>} : memref<8x128xf32, #tpu.memory_space<vmem>>, vector<8x128xf32>,
    return
  }
  func.func @transform_0(%arg0: i32) -> (i32, i32) {
    %c0_i32 = arith.constant 0 : i32
    %c0_i32_0 = arith.constant 0 : i32
    %c0_i32_1 = arith.constant 0 : i32
    return %c0_i32, %c0_i32_0 : i32, i32
  }
  func.func @transform_1(%arg0: i32) -> (i32, i32) {
    %c0_i32 = arith.constant 0 : i32
    %c0_i32_0 = arith.constant 0 : i32
    %c0_i32_1 = arith.constant 0 : i32
    return %c0_i32, %c0_i32_0 : i32, i32
  }
  func.func @transform_2(%arg0: i32) -> (i32, i32) {
    %c0_i32 = arith.constant 0 : i32
    %c0_i32_0 = arith.constant 0 : i32
    %c0_i32_1 = arith.constant 0 : i32
    return %c0_i32, %c0_i32_0 : i32, i32
  }
  func.func @transform_3(%arg0: i32) -> (i32, i32) {
    %c0_i32 = arith.constant 0 : i32
    %c0_i32_0 = arith.constant 0 : i32
    %c0_i32_1 = arith.constant 0 : i32
    return %c0_i32, %c0_i32_0 : i32, i32
  }
  func.func @transform_4(%arg0: i32) -> (i32, i32) {
    %c0_i32 = arith.constant 0 : i32
    %c0_i32_0 = arith.constant 0 : i32
    %c0_i32_1 = arith.constant 0 : i32
    return %c0_i32, %c0_i32_0 : i32, i32
  }
  func.func @transform_5(%arg0: i32) -> (i32, i32) {
    %c0_i32 = arith.constant 0 : i32
    %c0_i32_0 = arith.constant 0 : i32
    %c0_i32_1 = arith.constant 0 : i32
    return %c0_i32, %c0_i32_0 : i32, i32
  }
  func.func @transform_6(%arg0: i32) -> (i32, i32) {
    %c0_i32 = arith.constant 0 : i32
    %c0_i32_0 = arith.constant 0 : i32
    %c0_i32_1 = arith.constant 0 : i32
    return %c0_i32, %c0_i32_0 : i32, i32
  }
}

</mosaic_0001>

<llo_original>
// kernel: residual_block_forward.1
$region0: #{residual_block_forward.1}
  #allocation0 [shape = 'u32[]', space=smem, size = 0x4, offset = 0x4, fixed_abs, tag = 'smem constant byte address 0x4 - core index']
  #allocation1 [shape = 'u32[144,128]{1,0:T(1,128)}', space=vmem, size = 0x12000, scoped, tag = 'internal scratch']
  %s0 = inlined_call_operand.vmem [shape: f32[8,512], index: 0, kind: input, shape index: {}]
  %s1 = inlined_call_operand.vmem [shape: bf16[8,73], index: 1, kind: input, shape index: {}]
  %s2 = inlined_call_operand.vmem [shape: bf16[8,73], index: 2, kind: input, shape index: {}]
  %s3 = inlined_call_operand.vmem [shape: bf16[8,9], index: 3, kind: input, shape index: {}]
  %s4 = inlined_call_operand.vmem [shape: f32[9,512], index: 4, kind: input, shape index: {}]
  %s5 = inlined_call_operand.vmem [shape: f32[512,128], index: 5, kind: input, shape index: {}]
  %s6 = inlined_call_operand.vmem [shape: f32[8,128], index: 6, kind: output, shape index: {}]
  %s7 = sld [smem:[#allocation0]]
  $region34: #{residual_block_forward.1} parent=0
    _
  %s9 = ssub.s32 1, %s7
  %s10 = scalar_select 0, %s9, %s7
  // Predicated region
  $region2: #{residual_block_forward.1} parent=0 // pred_check
    _
  $region3: #{residual_block_forward.1} parent=0 // pred_check_branch
    %12 = sbr.rel (0) target = $region5
  $region4: #{residual_block_forward.1} parent=0 // pred_region
    _
  $region5: #{residual_block_forward.1} parent=0 // pred_fallthru
    _
  // Predicated region
  $region6: #{residual_block_forward.1} parent=0 // pred_check
    _
  $region7: #{residual_block_forward.1} parent=0 // pred_check_branch
    %14 = sbr.rel (0) target = $region9
  $region8: #{residual_block_forward.1} parent=0 // pred_region
    _
  $region9: #{residual_block_forward.1} parent=0 // pred_fallthru
    _
  // Predicated region
  $region10: #{residual_block_forward.1} parent=0 // pred_check
    _
  $region11: #{residual_block_forward.1} parent=0 // pred_check_branch
    %16 = sbr.rel (0) target = $region13
  $region12: #{residual_block_forward.1} parent=0 // pred_region
    _
  $region13: #{residual_block_forward.1} parent=0 // pred_fallthru
    _
  // Predicated region
  $region14: #{residual_block_forward.1} parent=0 // pred_check
    _
  $region15: #{residual_block_forward.1} parent=0 // pred_check_branch
    %18 = sbr.rel (0) target = $region17
  $region16: #{residual_block_forward.1} parent=0 // pred_region
    _
  $region17: #{residual_block_forward.1} parent=0 // pred_fallthru
    _
  // Predicated region
  $region18: #{residual_block_forward.1} parent=0 // pred_check
    _
  $region19: #{residual_block_forward.1} parent=0 // pred_check_branch
    %20 = sbr.rel (0) target = $region21
  $region20: #{residual_block_forward.1} parent=0 // pred_region
    _
  $region21: #{residual_block_forward.1} parent=0 // pred_fallthru
    _
  // Predicated region
  $region22: #{residual_block_forward.1} parent=0 // pred_check
    _
  $region23: #{residual_block_forward.1} parent=0 // pred_check_branch
    %22 = sbr.rel (0) target = $region25
  $region24: #{residual_block_forward.1} parent=0 // pred_region
    _
  $region25: #{residual_block_forward.1} parent=0 // pred_fallthru
    _
  %v24 = vld [vmem:[%s0] sm:$0xff]
  %v25 = vld [vmem:[%s0 + $0x8] sm:$0xff]
  %v26 = vld [vmem:[%s0 + $0x10] sm:$0xff]
  %v27 = vld [vmem:[%s0 + $0x18] sm:$0xff]
  %v28 = vld [vmem:[%s1] sm:$0xf]
  %v29 = vld [vmem:[%s2] sm:$0xf]
  %v30 = vld [vmem:[%s3] sm:$0xf]
  %v31 = vld [vmem:[%s5] sm:$0xff]
  %v32 = vld [vmem:[%s5 + $0x8] sm:$0xff]
  %v33 = vld [vmem:[%s5 + $0x10] sm:$0xff]
  %v34 = vld [vmem:[%s5 + $0x18] sm:$0xff]
  %v35 = vld [vmem:[%s5 + $0x20] sm:$0xff]
  %v36 = vld [vmem:[%s5 + $0x28] sm:$0xff]
  %v37 = vld [vmem:[%s5 + $0x30] sm:$0xff]
  %v38 = vld [vmem:[%s5 + $0x38] sm:$0xff]
  %v39 = vld [vmem:[%s5 + $0x40] sm:$0xff]
  %v40 = vld [vmem:[%s5 + $0x48] sm:$0xff]
  %v41 = vld [vmem:[%s5 + $0x50] sm:$0xff]
  %v42 = vld [vmem:[%s5 + $0x58] sm:$0xff]
  %v43 = vld [vmem:[%s5 + $0x60] sm:$0xff]
  %v44 = vld [vmem:[%s5 + $0x68] sm:$0xff]
  %v45 = vld [vmem:[%s5 + $0x70] sm:$0xff]
  %v46 = vld [vmem:[%s5 + $0x78] sm:$0xff]
  %v47 = vld [vmem:[%s5 + $0x80] sm:$0xff]
  %v48 = vld [vmem:[%s5 + $0x88] sm:$0xff]
  %v49 = vld [vmem:[%s5 + $0x90] sm:$0xff]
  %v50 = vld [vmem:[%s5 + $0x98] sm:$0xff]
  %v51 = vld [vmem:[%s5 + $0xa0] sm:$0xff]
  %v52 = vld [vmem:[%s5 + $0xa8] sm:$0xff]
  %v53 = vld [vmem:[%s5 + $0xb0] sm:$0xff]
  %v54 = vld [vmem:[%s5 + $0xb8] sm:$0xff]
  %v55 = vld [vmem:[%s5 + $0xc0] sm:$0xff]
  %v56 = vld [vmem:[%s5 + $0xc8] sm:$0xff]
  %v57 = vld [vmem:[%s5 + $0xd0] sm:$0xff]
  %v58 = vld [vmem:[%s5 + $0xd8] sm:$0xff]
  %v59 = vld [vmem:[%s5 + $0xe0] sm:$0xff]
  %v60 = vld [vmem:[%s5 + $0xe8] sm:$0xff]
  %v61 = vld [vmem:[%s5 + $0xf0] sm:$0xff]
  %v62 = vld [vmem:[%s5 + $0xf8] sm:$0xff]
  %v63 = vld [vmem:[%s5 + $0x100] sm:$0xff]
  %v64 = vld [vmem:[%s5 + $0x108] sm:$0xff]
  %v65 = vld [vmem:[%s5 + $0x110] sm:$0xff]
  %v66 = vld [vmem:[%s5 + $0x118] sm:$0xff]
  %v67 = vld [vmem:[%s5 + $0x120] sm:$0xff]
  %v68 = vld [vmem:[%s5 + $0x128] sm:$0xff]
  %v69 = vld [vmem:[%s5 + $0x130] sm:$0xff]
  %v70 = vld [vmem:[%s5 + $0x138] sm:$0xff]
  %v71 = vld [vmem:[%s5 + $0x140] sm:$0xff]
  %v72 = vld [vmem:[%s5 + $0x148] sm:$0xff]
  %v73 = vld [vmem:[%s5 + $0x150] sm:$0xff]
  %v74 = vld [vmem:[%s5 + $0x158] sm:$0xff]
  %v75 = vld [vmem:[%s5 + $0x160] sm:$0xff]
  %v76 = vld [vmem:[%s5 + $0x168] sm:$0xff]
  %v77 = vld [vmem:[%s5 + $0x170] sm:$0xff]
  %v78 = vld [vmem:[%s5 + $0x178] sm:$0xff]
  %v79 = vld [vmem:[%s5 + $0x180] sm:$0xff]
  %v80 = vld [vmem:[%s5 + $0x188] sm:$0xff]
  %v81 = vld [vmem:[%s5 + $0x190] sm:$0xff]
  %v82 = vld [vmem:[%s5 + $0x198] sm:$0xff]
  %v83 = vld [vmem:[%s5 + $0x1a0] sm:$0xff]
  %v84 = vld [vmem:[%s5 + $0x1a8] sm:$0xff]
  %v85 = vld [vmem:[%s5 + $0x1b0] sm:$0xff]
  %v86 = vld [vmem:[%s5 + $0x1b8] sm:$0xff]
  %v87 = vld [vmem:[%s5 + $0x1c0] sm:$0xff]
  %v88 = vld [vmem:[%s5 + $0x1c8] sm:$0xff]
  %v89 = vld [vmem:[%s5 + $0x1d0] sm:$0xff]
  %v90 = vld [vmem:[%s5 + $0x1d8] sm:$0xff]
  %v91 = vld [vmem:[%s5 + $0x1e0] sm:$0xff]
  %v92 = vld [vmem:[%s5 + $0x1e8] sm:$0xff]
  %v93 = vld [vmem:[%s5 + $0x1f0] sm:$0xff]
  %v94 = vld [vmem:[%s5 + $0x1f8] sm:$0xff]
  %v95 = vld [vmem:[%s4] ss:$8 sm:$0xf]
  %s96 = scalar_lea.vmem %s4, 1
  %v97 = vld [vmem:[%s96] ss:$8 sm:$0xf]
  %s98 = scalar_lea.vmem %s4, 2
  %v99 = vld [vmem:[%s98] ss:$8 sm:$0xf]
  %s100 = scalar_lea.vmem %s4, 3
  %v101 = vld [vmem:[%s100] ss:$8 sm:$0xf]
  %s102 = scalar_lea.vmem %s4, 5
  %v103 = vld [vmem:[%s102] ss:$8 sm:$0xf]
  %s104 = scalar_lea.vmem %s4, 6
  %v105 = vld [vmem:[%s104] ss:$8 sm:$0xf]
  %s106 = scalar_lea.vmem %s4, 7
  %v107 = vld [vmem:[%s106] ss:$8 sm:$0xf]
  %s108 = scalar_lea.vmem %s4, 32
  %v109 = vld [vmem:[%s108] ss:$8 sm:$0xf]
  %110 = vrot.lane.b32.xlu0 %v24, 17
  %v111 = vpop.permute.xlu0 %110
  %112 = vrot.lane.b32.xlu0 %v25, 17
  %v113 = vpop.permute.xlu0 %112
  %114 = vrot.lane.b32.xlu0 %v26, 17
  %v115 = vpop.permute.xlu0 %114
  %116 = vrot.lane.b32.xlu0 %v27, 17
  %v117 = vpop.permute.xlu0 %116
  %v118 = vlaneseq
  %v119 = vand.u32 %v118, 127
  %vm120 = vcmp.lt.s32.totalorder %v119, 17
  %v121 = vsel %vm120, %v115, %v117
  %v122 = vsel %vm120, %v113, %v115
  %v123 = vsel %vm120, %v111, %v113
  %v124 = vsel %vm120, %v117, %v111
  %v126 = vlaneseq
  %v127 = vshrl.u32 %v126, 7
  %v128 = vsub.s32 0, %v127
  %v129 = vrot.slane %v95, %v128
  %v130 = vlaneseq
  %v131 = vshrl.u32 %v130, 7
  %v132 = vsub.s32 1, %v131
  %v133 = vrot.slane %v95, %v132
  %v134 = vlaneseq
  %v135 = vshrl.u32 %v134, 7
  %v136 = vsub.s32 2, %v135
  %v137 = vrot.slane %v95, %v136
  %v138 = vlaneseq
  %v139 = vshrl.u32 %v138, 7
  %v140 = vsub.s32 3, %v139
  %v141 = vrot.slane %v95, %v140
  %v146 = vmul.f32 %v124, %v129
  %v147 = vmul.f32 %v123, %v133
  %v148 = vmul.f32 %v122, %v137
  %v149 = vmul.f32 %v121, %v141
  %150 = vrot.lane.b32.xlu0 %v24, 16
  %v151 = vpop.permute.xlu0 %150
  %152 = vrot.lane.b32.xlu0 %v25, 16
  %v153 = vpop.permute.xlu0 %152
  %154 = vrot.lane.b32.xlu0 %v26, 16
  %v155 = vpop.permute.xlu0 %154
  %156 = vrot.lane.b32.xlu0 %v27, 16
  %v157 = vpop.permute.xlu0 %156
  %vm158 = vcmp.lt.s32.totalorder %v119, 16
  %v159 = vsel %vm158, %v155, %v157
  %v160 = vsel %vm158, %v153, %v155
  %v161 = vsel %vm158, %v151, %v153
  %v162 = vsel %vm158, %v157, %v151
  %v164 = vlaneseq
  %v165 = vshrl.u32 %v164, 7
  %v166 = vsub.s32 0, %v165
  %v167 = vrot.slane %v97, %v166
  %v168 = vlaneseq
  %v169 = vshrl.u32 %v168, 7
  %v170 = vsub.s32 1, %v169
  %v171 = vrot.slane %v97, %v170
  %v172 = vlaneseq
  %v173 = vshrl.u32 %v172, 7
  %v174 = vsub.s32 2, %v173
  %v175 = vrot.slane %v97, %v174
  %v176 = vlaneseq
  %v177 = vshrl.u32 %v176, 7
  %v178 = vsub.s32 3, %v177
  %v179 = vrot.slane %v97, %v178
  %v184 = vmul.f32 %v162, %v167
  %v185 = vmul.f32 %v161, %v171
  %v186 = vmul.f32 %v160, %v175
  %v187 = vmul.f32 %v159, %v179
  %188 = vrot.lane.b32.xlu0 %v24, 15
  %v189 = vpop.permute.xlu0 %188
  %190 = vrot.lane.b32.xlu0 %v25, 15
  %v191 = vpop.permute.xlu0 %190
  %192 = vrot.lane.b32.xlu0 %v26, 15
  %v193 = vpop.permute.xlu0 %192
  %194 = vrot.lane.b32.xlu0 %v27, 15
  %v195 = vpop.permute.xlu0 %194
  %vm196 = vcmp.lt.s32.totalorder %v119, 15
  %v197 = vsel %vm196, %v193, %v195
  %v198 = vsel %vm196, %v191, %v193
  %v199 = vsel %vm196, %v189, %v191
  %v200 = vsel %vm196, %v195, %v189
  %v202 = vlaneseq
  %v203 = vshrl.u32 %v202, 7
  %v204 = vsub.s32 0, %v203
  %v205 = vrot.slane %v99, %v204
  %v206 = vlaneseq
  %v207 = vshrl.u32 %v206, 7
  %v208 = vsub.s32 1, %v207
  %v209 = vrot.slane %v99, %v208
  %v210 = vlaneseq
  %v211 = vshrl.u32 %v210, 7
  %v212 = vsub.s32 2, %v211
  %v213 = vrot.slane %v99, %v212
  %v214 = vlaneseq
  %v215 = vshrl.u32 %v214, 7
  %v216 = vsub.s32 3, %v215
  %v217 = vrot.slane %v99, %v216
  %v222 = vmul.f32 %v200, %v205
  %v223 = vmul.f32 %v199, %v209
  %v224 = vmul.f32 %v198, %v213
  %v225 = vmul.f32 %v197, %v217
  %226 = vrot.lane.b32.xlu0 %v24, 1
  %v227 = vpop.permute.xlu0 %226
  %228 = vrot.lane.b32.xlu0 %v25, 1
  %v229 = vpop.permute.xlu0 %228
  %230 = vrot.lane.b32.xlu0 %v26, 1
  %v231 = vpop.permute.xlu0 %230
  %232 = vrot.lane.b32.xlu0 %v27, 1
  %v233 = vpop.permute.xlu0 %232
  %vm234 = vcmp.lt.s32.totalorder %v119, 1
  %v235 = vsel %vm234, %v231, %v233
  %v236 = vsel %vm234, %v229, %v231
  %v237 = vsel %vm234, %v227, %v229
  %v238 = vsel %vm234, %v233, %v227
  %v240 = vlaneseq
  %v241 = vshrl.u32 %v240, 7
  %v242 = vsub.s32 0, %v241
  %v243 = vrot.slane %v101, %v242
  %v244 = vlaneseq
  %v245 = vshrl.u32 %v244, 7
  %v246 = vsub.s32 1, %v245
  %v247 = vrot.slane %v101, %v246
  %v248 = vlaneseq
  %v249 = vshrl.u32 %v248, 7
  %v250 = vsub.s32 2, %v249
  %v251 = vrot.slane %v101, %v250
  %v252 = vlaneseq
  %v253 = vshrl.u32 %v252, 7
  %v254 = vsub.s32 3, %v253
  %v255 = vrot.slane %v101, %v254
  %v260 = vmul.f32 %v238, %v243
  %v261 = vmul.f32 %v237, %v247
  %v262 = vmul.f32 %v236, %v251
  %v263 = vmul.f32 %v235, %v255
  %264 = vrot.lane.b32.xlu0 %v24, 127
  %v265 = vpop.permute.xlu0 %264
  %266 = vrot.lane.b32.xlu0 %v25, 127
  %v267 = vpop.permute.xlu0 %266
  %268 = vrot.lane.b32.xlu0 %v26, 127
  %v269 = vpop.permute.xlu0 %268
  %270 = vrot.lane.b32.xlu0 %v27, 127
  %v271 = vpop.permute.xlu0 %270
  %vm272 = vcmp.lt.s32.totalorder %v119, 127
  %v273 = vsel %vm272, %v269, %v271
  %v274 = vsel %vm272, %v267, %v269
  %v275 = vsel %vm272, %v265, %v267
  %v276 = vsel %vm272, %v271, %v265
  %v278 = vlaneseq
  %v279 = vshrl.u32 %v278, 7
  %v280 = vsub.s32 0, %v279
  %v281 = vrot.slane %v103, %v280
  %v282 = vlaneseq
  %v283 = vshrl.u32 %v282, 7
  %v284 = vsub.s32 1, %v283
  %v285 = vrot.slane %v103, %v284
  %v286 = vlaneseq
  %v287 = vshrl.u32 %v286, 7
  %v288 = vsub.s32 2, %v287
  %v289 = vrot.slane %v103, %v288
  %v290 = vlaneseq
  %v291 = vshrl.u32 %v290, 7
  %v292 = vsub.s32 3, %v291
  %v293 = vrot.slane %v103, %v292
  %v298 = vmul.f32 %v275, %v281
  %v299 = vmul.f32 %v274, %v285
  %v300 = vmul.f32 %v273, %v289
  %v301 = vmul.f32 %v276, %v293
  %302 = vrot.lane.b32.xlu0 %v24, 113
  %v303 = vpop.permute.xlu0 %302
  %304 = vrot.lane.b32.xlu0 %v25, 113
  %v305 = vpop.permute.xlu0 %304
  %306 = vrot.lane.b32.xlu0 %v26, 113
  %v307 = vpop.permute.xlu0 %306
  %308 = vrot.lane.b32.xlu0 %v27, 113
  %v309 = vpop.permute.xlu0 %308
  %vm310 = vcmp.lt.s32.totalorder %v119, 113
  %v311 = vsel %vm310, %v307, %v309
  %v312 = vsel %vm310, %v305, %v307
  %v313 = vsel %vm310, %v303, %v305
  %v314 = vsel %vm310, %v309, %v303
  %v316 = vlaneseq
  %v317 = vshrl.u32 %v316, 7
  %v318 = vsub.s32 0, %v317
  %v319 = vrot.slane %v105, %v318
  %v320 = vlaneseq
  %v321 = vshrl.u32 %v320, 7
  %v322 = vsub.s32 1, %v321
  %v323 = vrot.slane %v105, %v322
  %v324 = vlaneseq
  %v325 = vshrl.u32 %v324, 7
  %v326 = vsub.s32 2, %v325
  %v327 = vrot.slane %v105, %v326
  %v328 = vlaneseq
  %v329 = vshrl.u32 %v328, 7
  %v330 = vsub.s32 3, %v329
  %v331 = vrot.slane %v105, %v330
  %v336 = vmul.f32 %v313, %v319
  %v337 = vmul.f32 %v312, %v323
  %v338 = vmul.f32 %v311, %v327
  %v339 = vmul.f32 %v314, %v331
  %340 = vrot.lane.b32.xlu0 %v24, 112
  %v341 = vpop.permute.xlu0 %340
  %342 = vrot.lane.b32.xlu0 %v25, 112
  %v343 = vpop.permute.xlu0 %342
  %344 = vrot.lane.b32.xlu0 %v26, 112
  %v345 = vpop.permute.xlu0 %344
  %346 = vrot.lane.b32.xlu0 %v27, 112
  %v347 = vpop.permute.xlu0 %346
  %vm348 = vcmp.lt.s32.totalorder %v119, 112
  %v349 = vsel %vm348, %v345, %v347
  %v350 = vsel %vm348, %v343, %v345
  %v351 = vsel %vm348, %v341, %v343
  %v352 = vsel %vm348, %v347, %v341
  %v354 = vlaneseq
  %v355 = vshrl.u32 %v354, 7
  %v356 = vsub.s32 0, %v355
  %v357 = vrot.slane %v107, %v356
  %v358 = vlaneseq
  %v359 = vshrl.u32 %v358, 7
  %v360 = vsub.s32 1, %v359
  %v361 = vrot.slane %v107, %v360
  %v362 = vlaneseq
  %v363 = vshrl.u32 %v362, 7
  %v364 = vsub.s32 2, %v363
  %v365 = vrot.slane %v107, %v364
  %v366 = vlaneseq
  %v367 = vshrl.u32 %v366, 7
  %v368 = vsub.s32 3, %v367
  %v369 = vrot.slane %v107, %v368
  %v374 = vmul.f32 %v351, %v357
  %v375 = vmul.f32 %v350, %v361
  %v376 = vmul.f32 %v349, %v365
  %v377 = vmul.f32 %v352, %v369
  %378 = vrot.lane.b32.xlu0 %v24, 111
  %v379 = vpop.permute.xlu0 %378
  %380 = vrot.lane.b32.xlu0 %v25, 111
  %v381 = vpop.permute.xlu0 %380
  %382 = vrot.lane.b32.xlu0 %v26, 111
  %v383 = vpop.permute.xlu0 %382
  %384 = vrot.lane.b32.xlu0 %v27, 111
  %v385 = vpop.permute.xlu0 %384
  %vm386 = vcmp.lt.s32.totalorder %v119, 111
  %v387 = vsel %vm386, %v383, %v385
  %v388 = vsel %vm386, %v381, %v383
  %v389 = vsel %vm386, %v379, %v381
  %v390 = vsel %vm386, %v385, %v379
  %v392 = vlaneseq
  %v393 = vshrl.u32 %v392, 7
  %v394 = vsub.s32 0, %v393
  %v395 = vrot.slane %v109, %v394
  %v396 = vlaneseq
  %v397 = vshrl.u32 %v396, 7
  %v398 = vsub.s32 1, %v397
  %v399 = vrot.slane %v109, %v398
  %v400 = vlaneseq
  %v401 = vshrl.u32 %v400, 7
  %v402 = vsub.s32 2, %v401
  %v403 = vrot.slane %v109, %v402
  %v404 = vlaneseq
  %v405 = vshrl.u32 %v404, 7
  %v406 = vsub.s32 3, %v405
  %v407 = vrot.slane %v109, %v406
  %v412 = vmul.f32 %v389, %v395
  %v413 = vmul.f32 %v388, %v399
  %v414 = vmul.f32 %v387, %v403
  %v415 = vmul.f32 %v390, %v407
  %v416 = vpack.c.bf16 %v184, %v146
  %v417 = vpack.c.bf16 %v185, %v147
  %v418 = vpack.c.bf16 %v186, %v148
  %v419 = vpack.c.bf16 %v187, %v149
  %v420 = vpack.c.bf16 %v260, %v222
  %v421 = vpack.c.bf16 %v261, %v223
  %v422 = vpack.c.bf16 %v262, %v224
  %v423 = vpack.c.bf16 %v263, %v225
  %v424 = vpack.c.bf16 %v298, %v24
  %v425 = vpack.c.bf16 %v299, %v25
  %v426 = vpack.c.bf16 %v300, %v26
  %v427 = vpack.c.bf16 %v301, %v27
  %v428 = vpack.c.bf16 %v374, %v336
  %v429 = vpack.c.bf16 %v375, %v337
  %v430 = vpack.c.bf16 %v376, %v338
  %v431 = vpack.c.bf16 %v377, %v339
  %v432 = vpack.c.bf16 1.0, %v412
  %v433 = vpack.c.bf16 1.0, %v413
  %v434 = vpack.c.bf16 1.0, %v414
  %v435 = vpack.c.bf16 1.0, %v415
  %vm436 = vcmask 596992
  %v438 = vsel %vm436, %v28, 0
  %vm440 = vcmask 1043456
  %vm441 = vcmask 1044480
  %v442 = vsel %vm440, 4294967295, 65535
  %v443 = vsel %vm441, %v442, 0
  %v445 = vand.u32 %v432, %v443
  %v448 = vand.u32 %v433, %v443
  %v451 = vand.u32 %v434, %v443
  %v454 = vand.u32 %v435, %v443
  %456 = vmatprep.subr.bf16.mxu0 0
  %457 = vmatpush1.bf16.msra.mxu0 0
  %458 = vmatprep.subr.bf16.mxu0 0
  %459 = vmatpush1.bf16.msra.mxu0 0
  %460 = vmatprep.subr.bf16.mxu0 0
  %461 = vmatpush1.bf16.msra.mxu0 0
  %462 = vmatprep.subr.bf16.mxu0 %v448
  %463 = vmatpush1.bf16.msra.mxu0 %v445
  %464 = vmatprep.subr.bf16.mxu0 %v429
  %465 = vmatpush1.bf16.msra.mxu0 %v428
  %466 = vmatprep.subr.bf16.mxu0 %v425
  %467 = vmatpush1.bf16.msra.mxu0 %v424
  %468 = vmatprep.subr.bf16.mxu0 %v421
  %469 = vmatpush1.bf16.msra.mxu0 %v420
  %470 = vmatprep.subr.bf16.mxu0 %v417
  %471 = vmatpush1.bf16.msra.mxu0 %v416
  %472 = vmatprep.subr.bf16.mxu0 0
  %473 = vmatpush2.bf16.msra.mxu0 0
  %474 = vmatprep.subr.bf16.mxu0 0
  %475 = vmatpush2.bf16.msra.mxu0 0
  %476 = vmatprep.subr.bf16.mxu0 0
  %477 = vmatpush2.bf16.msra.mxu0 0
  %478 = vmatprep.subr.bf16.mxu0 0
  %479 = vmatpush2.bf16.msra.mxu0 0
  %480 = vmatprep.subr.bf16.mxu0 0
  %481 = vmatpush2.bf16.msra.mxu0 0
  %482 = vmatprep.subr.bf16.mxu0 0
  %483 = vmatpush2.bf16.msra.mxu0 0
  %484 = vmatprep.subr.bf16.mxu0 0
  %485 = vmatpush2.bf16.msra.mxu0 0
  %486 = vmatprep.subr.bf16.mxu0 0
  %487 = vmatpush2.bf16.msra.mxu0 0
  %488 = vmatprep.mubr.bf16.mxu0 0
  %489 = vmatmul.mubr.bf16.gmra.mxu0 %v438
  %v490 = vpop.f32.mrf.mxu0
  %v491 = vadd.f32 0.0, %v490
  %v492 = vpop.f32.mrf.mxu0
  %v493 = vadd.f32 0.0, %v492
  %v494 = vpop.f32.mrf.mxu0
  %v495 = vpop.f32.mrf.mxu0
  %496 = vdwg.mxu0
  %497 = vmatprep.subr.bf16.mxu0 0
  %498 = vmatpush1.bf16.msra.mxu0 0
  %499 = vmatprep.subr.bf16.mxu0 0
  %500 = vmatpush1.bf16.msra.mxu0 0
  %501 = vmatprep.subr.bf16.mxu0 0
  %502 = vmatpush1.bf16.msra.mxu0 0
  %503 = vmatprep.subr.bf16.mxu0 %v454
  %504 = vmatpush1.bf16.msra.mxu0 %v451
  %505 = vmatprep.subr.bf16.mxu0 %v431
  %506 = vmatpush1.bf16.msra.mxu0 %v430
  %507 = vmatprep.subr.bf16.mxu0 %v427
  %508 = vmatpush1.bf16.msra.mxu0 %v426
  %509 = vmatprep.subr.bf16.mxu0 %v423
  %510 = vmatpush1.bf16.msra.mxu0 %v422
  %511 = vmatprep.subr.bf16.mxu0 %v419
  %512 = vmatpush1.bf16.msra.mxu0 %v418
  %513 = vmatprep.subr.bf16.mxu0 0
  %514 = vmatpush2.bf16.msra.mxu0 0
  %515 = vmatprep.subr.bf16.mxu0 0
  %516 = vmatpush2.bf16.msra.mxu0 0
  %517 = vmatprep.subr.bf16.mxu0 0
  %518 = vmatpush2.bf16.msra.mxu0 0
  %519 = vmatprep.subr.bf16.mxu0 0
  %520 = vmatpush2.bf16.msra.mxu0 0
  %521 = vmatprep.subr.bf16.mxu0 0
  %522 = vmatpush2.bf16.msra.mxu0 0
  %523 = vmatprep.subr.bf16.mxu0 0
  %524 = vmatpush2.bf16.msra.mxu0 0
  %525 = vmatprep.subr.bf16.mxu0 0
  %526 = vmatpush2.bf16.msra.mxu0 0
  %527 = vmatprep.subr.bf16.mxu0 0
  %528 = vmatpush2.bf16.msra.mxu0 0
  %529 = vmatprep.mubr.bf16.mxu0 0
  %530 = vmatmul.mubr.bf16.gmra.mxu0 %v438
  %v531 = vpop.f32.mrf.mxu0
  %v532 = vadd.f32 0.0, %v531
  %v533 = vpop.f32.mrf.mxu0
  %v534 = vadd.f32 0.0, %v533
  %v535 = vpop.f32.mrf.mxu0
  %v536 = vpop.f32.mrf.mxu0
  %537 = vdwg.mxu0
  %vm538 = vcmp.gt.f32.partialorder %v491, 0.0
  %vm539 = vcmp.gt.f32.partialorder %v493, 0.0
  %vm540 = vcmp.gt.f32.partialorder %v532, 0.0
  %vm541 = vcmp.gt.f32.partialorder %v534, 0.0
  %v542 = vmul.f32 %v491, 1.442695
  %v543 = vpow.pop %v542
  %v544 = vmul.f32 %v493, 1.442695
  %v545 = vpow.pop %v544
  %v546 = vmul.f32 %v532, 1.442695
  %v547 = vpow.pop %v546
  %v548 = vmul.f32 %v534, 1.442695
  %v549 = vpow.pop %v548
  %v550 = vsub.f32 %v543, 1.0
  %v551 = vsub.f32 %v545, 1.0
  %v552 = vsub.f32 %v547, 1.0
  %v553 = vsub.f32 %v549, 1.0
  %v554 = vsel %vm538, %v491, %v550
  %v555 = vsel %vm539, %v493, %v551
  %v556 = vsel %vm540, %v532, %v552
  %v557 = vsel %vm541, %v534, %v553
  %558 = vrot.lane.b32.xlu0 %v554, 17
  %v559 = vpop.permute.xlu0 %558
  %560 = vrot.lane.b32.xlu0 %v555, 17
  %v561 = vpop.permute.xlu0 %560
  %562 = vrot.lane.b32.xlu0 %v556, 17
  %v563 = vpop.permute.xlu0 %562
  %564 = vrot.lane.b32.xlu0 %v557, 17
  %v565 = vpop.permute.xlu0 %564
  %v566 = vsel %vm120, %v563, %v565
  %v567 = vsel %vm120, %v561, %v563
  %v568 = vsel %vm120, %v559, %v561
  %v569 = vsel %vm120, %v565, %v559
  %v570 = vmul.f32 %v569, %v129
  %v571 = vmul.f32 %v568, %v133
  %v572 = vmul.f32 %v567, %v137
  %v573 = vmul.f32 %v566, %v141
  %574 = vrot.lane.b32.xlu0 %v554, 16
  %v575 = vpop.permute.xlu0 %574
  %576 = vrot.lane.b32.xlu0 %v555, 16
  %v577 = vpop.permute.xlu0 %576
  %578 = vrot.lane.b32.xlu0 %v556, 16
  %v579 = vpop.permute.xlu0 %578
  %580 = vrot.lane.b32.xlu0 %v557, 16
  %v581 = vpop.permute.xlu0 %580
  %v582 = vsel %vm158, %v579, %v581
  %v583 = vsel %vm158, %v577, %v579
  %v584 = vsel %vm158, %v575, %v577
  %v585 = vsel %vm158, %v581, %v575
  %v586 = vmul.f32 %v585, %v167
  %v587 = vmul.f32 %v584, %v171
  %v588 = vmul.f32 %v583, %v175
  %v589 = vmul.f32 %v582, %v179
  %590 = vrot.lane.b32.xlu0 %v554, 15
  %v591 = vpop.permute.xlu0 %590
  %592 = vrot.lane.b32.xlu0 %v555, 15
  %v593 = vpop.permute.xlu0 %592
  %594 = vrot.lane.b32.xlu0 %v556, 15
  %v595 = vpop.permute.xlu0 %594
  %596 = vrot.lane.b32.xlu0 %v557, 15
  %v597 = vpop.permute.xlu0 %596
  %v598 = vsel %vm196, %v595, %v597
  %v599 = vsel %vm196, %v593, %v595
  %v600 = vsel %vm196, %v591, %v593
  %v601 = vsel %vm196, %v597, %v591
  %v602 = vmul.f32 %v601, %v205
  %v603 = vmul.f32 %v600, %v209
  %v604 = vmul.f32 %v599, %v213
  %v605 = vmul.f32 %v598, %v217
  %606 = vrot.lane.b32.xlu0 %v554, 1
  %v607 = vpop.permute.xlu0 %606
  %608 = vrot.lane.b32.xlu0 %v555, 1
  %v609 = vpop.permute.xlu0 %608
  %610 = vrot.lane.b32.xlu0 %v556, 1
  %v611 = vpop.permute.xlu0 %610
  %612 = vrot.lane.b32.xlu0 %v557, 1
  %v613 = vpop.permute.xlu0 %612
  %v614 = vsel %vm234, %v611, %v613
  %v615 = vsel %vm234, %v609, %v611
  %v616 = vsel %vm234, %v607, %v609
  %v617 = vsel %vm234, %v613, %v607
  %v618 = vmul.f32 %v617, %v243
  %v619 = vmul.f32 %v616, %v247
  %v620 = vmul.f32 %v615, %v251
  %v621 = vmul.f32 %v614, %v255
  %622 = vrot.lane.b32.xlu0 %v554, 127
  %v623 = vpop.permute.xlu0 %622
  %624 = vrot.lane.b32.xlu0 %v555, 127
  %v625 = vpop.permute.xlu0 %624
  %626 = vrot.lane.b32.xlu0 %v556, 127
  %v627 = vpop.permute.xlu0 %626
  %628 = vrot.lane.b32.xlu0 %v557, 127
  %v629 = vpop.permute.xlu0 %628
  %v630 = vsel %vm272, %v627, %v629
  %v631 = vsel %vm272, %v625, %v627
  %v632 = vsel %vm272, %v623, %v625
  %v633 = vsel %vm272, %v629, %v623
  %v634 = vmul.f32 %v632, %v281
  %v635 = vmul.f32 %v631, %v285
  %v636 = vmul.f32 %v630, %v289
  %v637 = vmul.f32 %v633, %v293
  %638 = vrot.lane.b32.xlu0 %v554, 113
  %v639 = vpop.permute.xlu0 %638
  %640 = vrot.lane.b32.xlu0 %v555, 113
  %v641 = vpop.permute.xlu0 %640
  %642 = vrot.lane.b32.xlu0 %v556, 113
  %v643 = vpop.permute.xlu0 %642
  %644 = vrot.lane.b32.xlu0 %v557, 113
  %v645 = vpop.permute.xlu0 %644
  %v646 = vsel %vm310, %v643, %v645
  %v647 = vsel %vm310, %v641, %v643
  %v648 = vsel %vm310, %v639, %v641
  %v649 = vsel %vm310, %v645, %v639
  %v650 = vmul.f32 %v648, %v319
  %v651 = vmul.f32 %v647, %v323
  %v652 = vmul.f32 %v646, %v327
  %v653 = vmul.f32 %v649, %v331
  %654 = vrot.lane.b32.xlu0 %v554, 112
  %v655 = vpop.permute.xlu0 %654
  %656 = vrot.lane.b32.xlu0 %v555, 112
  %v657 = vpop.permute.xlu0 %656
  %658 = vrot.lane.b32.xlu0 %v556, 112
  %v659 = vpop.permute.xlu0 %658
  %660 = vrot.lane.b32.xlu0 %v557, 112
  %v661 = vpop.permute.xlu0 %660
  %v662 = vsel %vm348, %v659, %v661
  %v663 = vsel %vm348, %v657, %v659
  %v664 = vsel %vm348, %v655, %v657
  %v665 = vsel %vm348, %v661, %v655
  %v666 = vmul.f32 %v664, %v357
  %v667 = vmul.f32 %v663, %v361
  %v668 = vmul.f32 %v662, %v365
  %v669 = vmul.f32 %v665, %v369
  %670 = vrot.lane.b32.xlu0 %v554, 111
  %v671 = vpop.permute.xlu0 %670
  %672 = vrot.lane.b32.xlu0 %v555, 111
  %v673 = vpop.permute.xlu0 %672
  %674 = vrot.lane.b32.xlu0 %v556, 111
  %v675 = vpop.permute.xlu0 %674
  %676 = vrot.lane.b32.xlu0 %v557, 111
  %v677 = vpop.permute.xlu0 %676
  %v678 = vsel %vm386, %v675, %v677
  %v679 = vsel %vm386, %v673, %v675
  %v680 = vsel %vm386, %v671, %v673
  %v681 = vsel %vm386, %v677, %v671
  %v682 = vmul.f32 %v680, %v395
  %v683 = vmul.f32 %v679, %v399
  %v684 = vmul.f32 %v678, %v403
  %v685 = vmul.f32 %v681, %v407
  %v686 = vpack.c.bf16 %v586, %v570
  %v687 = vpack.c.bf16 %v587, %v571
  %v688 = vpack.c.bf16 %v588, %v572
  %v689 = vpack.c.bf16 %v589, %v573
  %v690 = vpack.c.bf16 %v618, %v602
  %v691 = vpack.c.bf16 %v619, %v603
  %v692 = vpack.c.bf16 %v620, %v604
  %v693 = vpack.c.bf16 %v621, %v605
  %v694 = vpack.c.bf16 %v634, %v554
  %v695 = vpack.c.bf16 %v635, %v555
  %v696 = vpack.c.bf16 %v636, %v556
  %v697 = vpack.c.bf16 %v637, %v557
  %v698 = vpack.c.bf16 %v666, %v650
  %v699 = vpack.c.bf16 %v667, %v651
  %v700 = vpack.c.bf16 %v668, %v652
  %v701 = vpack.c.bf16 %v669, %v653
  %v702 = vpack.c.bf16 1.0, %v682
  %v703 = vpack.c.bf16 1.0, %v683
  %v704 = vpack.c.bf16 1.0, %v684
  %v705 = vpack.c.bf16 1.0, %v685
  %v707 = vsel %vm436, %v29, 0
  %v710 = vand.u32 %v702, %v443
  %v713 = vand.u32 %v703, %v443
  %v716 = vand.u32 %v704, %v443
  %v719 = vand.u32 %v705, %v443
  %721 = vmatprep.subr.bf16.mxu0 0
  %722 = vmatpush1.bf16.msra.mxu0 0
  %723 = vmatprep.subr.bf16.mxu0 0
  %724 = vmatpush1.bf16.msra.mxu0 0
  %725 = vmatprep.subr.bf16.mxu0 0
  %726 = vmatpush1.bf16.msra.mxu0 0
  %727 = vmatprep.subr.bf16.mxu0 %v713
  %728 = vmatpush1.bf16.msra.mxu0 %v710
  %729 = vmatprep.subr.bf16.mxu0 %v699
  %730 = vmatpush1.bf16.msra.mxu0 %v698
  %731 = vmatprep.subr.bf16.mxu0 %v695
  %732 = vmatpush1.bf16.msra.mxu0 %v694
  %733 = vmatprep.subr.bf16.mxu0 %v691
  %734 = vmatpush1.bf16.msra.mxu0 %v690
  %735 = vmatprep.subr.bf16.mxu0 %v687
  %736 = vmatpush1.bf16.msra.mxu0 %v686
  %737 = vmatprep.subr.bf16.mxu0 0
  %738 = vmatpush2.bf16.msra.mxu0 0
  %739 = vmatprep.subr.bf16.mxu0 0
  %740 = vmatpush2.bf16.msra.mxu0 0
  %741 = vmatprep.subr.bf16.mxu0 0
  %742 = vmatpush2.bf16.msra.mxu0 0
  %743 = vmatprep.subr.bf16.mxu0 0
  %744 = vmatpush2.bf16.msra.mxu0 0
  %745 = vmatprep.subr.bf16.mxu0 0
  %746 = vmatpush2.bf16.msra.mxu0 0
  %747 = vmatprep.subr.bf16.mxu0 0
  %748 = vmatpush2.bf16.msra.mxu0 0
  %749 = vmatprep.subr.bf16.mxu0 0
  %750 = vmatpush2.bf16.msra.mxu0 0
  %751 = vmatprep.subr.bf16.mxu0 0
  %752 = vmatpush2.bf16.msra.mxu0 0
  %753 = vmatprep.mubr.bf16.mxu0 0
  %754 = vmatmul.mubr.bf16.gmra.mxu0 %v707
  %v755 = vpop.f32.mrf.mxu0
  %v756 = vadd.f32 0.0, %v755
  %v757 = vpop.f32.mrf.mxu0
  %v758 = vadd.f32 0.0, %v757
  %v759 = vpop.f32.mrf.mxu0
  %v760 = vpop.f32.mrf.mxu0
  %761 = vdwg.mxu0
  %762 = vmatprep.subr.bf16.mxu0 0
  %763 = vmatpush1.bf16.msra.mxu0 0
  %764 = vmatprep.subr.bf16.mxu0 0
  %765 = vmatpush1.bf16.msra.mxu0 0
  %766 = vmatprep.subr.bf16.mxu0 0
  %767 = vmatpush1.bf16.msra.mxu0 0
  %768 = vmatprep.subr.bf16.mxu0 %v719
  %769 = vmatpush1.bf16.msra.mxu0 %v716
  %770 = vmatprep.subr.bf16.mxu0 %v701
  %771 = vmatpush1.bf16.msra.mxu0 %v700
  %772 = vmatprep.subr.bf16.mxu0 %v697
  %773 = vmatpush1.bf16.msra.mxu0 %v696
  %774 = vmatprep.subr.bf16.mxu0 %v693
  %775 = vmatpush1.bf16.msra.mxu0 %v692
  %776 = vmatprep.subr.bf16.mxu0 %v689
  %777 = vmatpush1.bf16.msra.mxu0 %v688
  %778 = vmatprep.subr.bf16.mxu0 0
  %779 = vmatpush2.bf16.msra.mxu0 0
  %780 = vmatprep.subr.bf16.mxu0 0
  %781 = vmatpush2.bf16.msra.mxu0 0
  %782 = vmatprep.subr.bf16.mxu0 0
  %783 = vmatpush2.bf16.msra.mxu0 0
  %784 = vmatprep.subr.bf16.mxu0 0
  %785 = vmatpush2.bf16.msra.mxu0 0
  %786 = vmatprep.subr.bf16.mxu0 0
  %787 = vmatpush2.bf16.msra.mxu0 0
  %788 = vmatprep.subr.bf16.mxu0 0
  %789 = vmatpush2.bf16.msra.mxu0 0
  %790 = vmatprep.subr.bf16.mxu0 0
  %791 = vmatpush2.bf16.msra.mxu0 0
  %792 = vmatprep.subr.bf16.mxu0 0
  %793 = vmatpush2.bf16.msra.mxu0 0
  %794 = vmatprep.mubr.bf16.mxu0 0
  %795 = vmatmul.mubr.bf16.gmra.mxu0 %v707
  %v796 = vpop.f32.mrf.mxu0
  %v797 = vadd.f32 0.0, %v796
  %v798 = vpop.f32.mrf.mxu0
  %v799 = vadd.f32 0.0, %v798
  %v800 = vpop.f32.mrf.mxu0
  %v801 = vpop.f32.mrf.mxu0
  %802 = vdwg.mxu0
  %vm803 = vcmp.gt.f32.partialorder %v756, 0.0
  %vm804 = vcmp.gt.f32.partialorder %v758, 0.0
  %vm805 = vcmp.gt.f32.partialorder %v797, 0.0
  %vm806 = vcmp.gt.f32.partialorder %v799, 0.0
  %v807 = vmul.f32 %v756, 1.442695
  %v808 = vpow.pop %v807
  %v809 = vmul.f32 %v758, 1.442695
  %v810 = vpow.pop %v809
  %v811 = vmul.f32 %v797, 1.442695
  %v812 = vpow.pop %v811
  %v813 = vmul.f32 %v799, 1.442695
  %v814 = vpow.pop %v813
  %v815 = vsub.f32 %v808, 1.0
  %v816 = vsub.f32 %v810, 1.0
  %v817 = vsub.f32 %v812, 1.0
  %v818 = vsub.f32 %v814, 1.0
  %v819 = vsel %vm803, %v756, %v815
  %v820 = vsel %vm804, %v758, %v816
  %v821 = vsel %vm805, %v797, %v817
  %v822 = vsel %vm806, %v799, %v818
  %v823 = vpack.c.bf16 1.0, %v24
  %v824 = vpack.c.bf16 1.0, %v25
  %v825 = vpack.c.bf16 1.0, %v26
  %v826 = vpack.c.bf16 1.0, %v27
  %vm827 = vcmask 72704
  %v829 = vsel %vm827, %v30, 0
  %v832 = vand.u32 %v823, %v443
  %v835 = vand.u32 %v824, %v443
  %v838 = vand.u32 %v825, %v443
  %v841 = vand.u32 %v826, %v443
  %843 = vmatprep.subr.bf16.mxu0 0
  %844 = vmatpush1.bf16.msra.mxu0 0
  %845 = vmatprep.subr.bf16.mxu0 0
  %846 = vmatpush1.bf16.msra.mxu0 0
  %847 = vmatprep.subr.bf16.mxu0 0
  %848 = vmatpush1.bf16.msra.mxu0 0
  %849 = vmatprep.subr.bf16.mxu0 0
  %850 = vmatpush1.bf16.msra.mxu0 0
  %851 = vmatprep.subr.bf16.mxu0 0
  %852 = vmatpush1.bf16.msra.mxu0 0
  %853 = vmatprep.subr.bf16.mxu0 0
  %854 = vmatpush1.bf16.msra.mxu0 0
  %855 = vmatprep.subr.bf16.mxu0 0
  %856 = vmatpush1.bf16.msra.mxu0 0
  %857 = vmatprep.subr.bf16.mxu0 %v835
  %858 = vmatpush1.bf16.msra.mxu0 %v832
  %859 = vmatprep.subr.bf16.mxu0 0
  %860 = vmatpush2.bf16.msra.mxu0 0
  %861 = vmatprep.subr.bf16.mxu0 0
  %862 = vmatpush2.bf16.msra.mxu0 0
  %863 = vmatprep.subr.bf16.mxu0 0
  %864 = vmatpush2.bf16.msra.mxu0 0
  %865 = vmatprep.subr.bf16.mxu0 0
  %866 = vmatpush2.bf16.msra.mxu0 0
  %867 = vmatprep.subr.bf16.mxu0 0
  %868 = vmatpush2.bf16.msra.mxu0 0
  %869 = vmatprep.subr.bf16.mxu0 0
  %870 = vmatpush2.bf16.msra.mxu0 0
  %871 = vmatprep.subr.bf16.mxu0 0
  %872 = vmatpush2.bf16.msra.mxu0 0
  %873 = vmatprep.subr.bf16.mxu0 0
  %874 = vmatpush2.bf16.msra.mxu0 0
  %875 = vmatprep.mubr.bf16.mxu0 0
  %876 = vmatmul.mubr.bf16.gmra.mxu0 %v829
  %v877 = vpop.f32.mrf.mxu0
  %v878 = vadd.f32 0.0, %v877
  %v879 = vpop.f32.mrf.mxu0
  %v880 = vadd.f32 0.0, %v879
  %v881 = vpop.f32.mrf.mxu0
  %v882 = vpop.f32.mrf.mxu0
  %883 = vdwg.mxu0
  %884 = vmatprep.subr.bf16.mxu0 0
  %885 = vmatpush1.bf16.msra.mxu0 0
  %886 = vmatprep.subr.bf16.mxu0 0
  %887 = vmatpush1.bf16.msra.mxu0 0
  %888 = vmatprep.subr.bf16.mxu0 0
  %889 = vmatpush1.bf16.msra.mxu0 0
  %890 = vmatprep.subr.bf16.mxu0 0
  %891 = vmatpush1.bf16.msra.mxu0 0
  %892 = vmatprep.subr.bf16.mxu0 0
  %893 = vmatpush1.bf16.msra.mxu0 0
  %894 = vmatprep.subr.bf16.mxu0 0
  %895 = vmatpush1.bf16.msra.mxu0 0
  %896 = vmatprep.subr.bf16.mxu0 0
  %897 = vmatpush1.bf16.msra.mxu0 0
  %898 = vmatprep.subr.bf16.mxu0 %v841
  %899 = vmatpush1.bf16.msra.mxu0 %v838
  %900 = vmatprep.subr.bf16.mxu0 0
  %901 = vmatpush2.bf16.msra.mxu0 0
  %902 = vmatprep.subr.bf16.mxu0 0
  %903 = vmatpush2.bf16.msra.mxu0 0
  %904 = vmatprep.subr.bf16.mxu0 0
  %905 = vmatpush2.bf16.msra.mxu0 0
  %906 = vmatprep.subr.bf16.mxu0 0
  %907 = vmatpush2.bf16.msra.mxu0 0
  %908 = vmatprep.subr.bf16.mxu0 0
  %909 = vmatpush2.bf16.msra.mxu0 0
  %910 = vmatprep.subr.bf16.mxu0 0
  %911 = vmatpush2.bf16.msra.mxu0 0
  %912 = vmatprep.subr.bf16.mxu0 0
  %913 = vmatpush2.bf16.msra.mxu0 0
  %914 = vmatprep.subr.bf16.mxu0 0
  %915 = vmatpush2.bf16.msra.mxu0 0
  %916 = vmatprep.mubr.bf16.mxu0 0
  %917 = vmatmul.mubr.bf16.gmra.mxu0 %v829
  %v918 = vpop.f32.mrf.mxu0
  %v919 = vadd.f32 0.0, %v918
  %v920 = vpop.f32.mrf.mxu0
  %v921 = vadd.f32 0.0, %v920
  %v922 = vpop.f32.mrf.mxu0
  %v923 = vpop.f32.mrf.mxu0
  %924 = vdwg.mxu0
  %v925 = vadd.f32 %v819, %v878
  %v926 = vadd.f32 %v820, %v880
  %v927 = vadd.f32 %v821, %v919
  %v928 = vadd.f32 %v822, %v921
  %929 = vmatprep.subr.mxu0 0.0
  %930 = vmatpush1.msra.mxu0 %v46
  %931 = vmatprep.subr.mxu0 0.0
  %932 = vmatpush1.msra.mxu0 %v45
  %933 = vmatprep.subr.mxu0 0.0
  %934 = vmatpush1.msra.mxu0 %v44
  %935 = vmatprep.subr.mxu0 0.0
  %936 = vmatpush1.msra.mxu0 %v43
  %937 = vmatprep.subr.mxu0 0.0
  %938 = vmatpush1.msra.mxu0 %v42
  %939 = vmatprep.subr.mxu0 0.0
  %940 = vmatpush1.msra.mxu0 %v41
  %941 = vmatprep.subr.mxu0 0.0
  %942 = vmatpush1.msra.mxu0 %v40
  %943 = vmatprep.subr.mxu0 0.0
  %944 = vmatpush1.msra.mxu0 %v39
  %945 = vmatprep.subr.mxu0 0.0
  %946 = vmatpush1.msra.mxu0 %v38
  %947 = vmatprep.subr.mxu0 0.0
  %948 = vmatpush1.msra.mxu0 %v37
  %949 = vmatprep.subr.mxu0 0.0
  %950 = vmatpush1.msra.mxu0 %v36
  %951 = vmatprep.subr.mxu0 0.0
  %952 = vmatpush1.msra.mxu0 %v35
  %953 = vmatprep.subr.mxu0 0.0
  %954 = vmatpush1.msra.mxu0 %v34
  %955 = vmatprep.subr.mxu0 0.0
  %956 = vmatpush1.msra.mxu0 %v33
  %957 = vmatprep.subr.mxu0 0.0
  %958 = vmatpush1.msra.mxu0 %v32
  %959 = vmatprep.subr.mxu0 0.0
  %960 = vmatpush1.msra.mxu0 %v31
  %961 = vmatprep.subr.mxu0 0.0
  %962 = vmatpush2.msra.mxu0 %v62
  %963 = vmatprep.subr.mxu0 0.0
  %964 = vmatpush2.msra.mxu0 %v61
  %965 = vmatprep.subr.mxu0 0.0
  %966 = vmatpush2.msra.mxu0 %v60
  %967 = vmatprep.subr.mxu0 0.0
  %968 = vmatpush2.msra.mxu0 %v59
  %969 = vmatprep.subr.mxu0 0.0
  %970 = vmatpush2.msra.mxu0 %v58
  %971 = vmatprep.subr.mxu0 0.0
  %972 = vmatpush2.msra.mxu0 %v57
  %973 = vmatprep.subr.mxu0 0.0
  %974 = vmatpush2.msra.mxu0 %v56
  %975 = vmatprep.subr.mxu0 0.0
  %976 = vmatpush2.msra.mxu0 %v55
  %977 = vmatprep.subr.mxu0 0.0
  %978 = vmatpush2.msra.mxu0 %v54
  %979 = vmatprep.subr.mxu0 0.0
  %980 = vmatpush2.msra.mxu0 %v53
  %981 = vmatprep.subr.mxu0 0.0
  %982 = vmatpush2.msra.mxu0 %v52
  %983 = vmatprep.subr.mxu0 0.0
  %984 = vmatpush2.msra.mxu0 %v51
  %985 = vmatprep.subr.mxu0 0.0
  %986 = vmatpush2.msra.mxu0 %v50
  %987 = vmatprep.subr.mxu0 0.0
  %988 = vmatpush2.msra.mxu0 %v49
  %989 = vmatprep.subr.mxu0 0.0
  %990 = vmatpush2.msra.mxu0 %v48
  %991 = vmatprep.subr.mxu0 0.0
  %992 = vmatpush2.msra.mxu0 %v47
  %993 = vmatprep.mubr.f32.mxu0 %v926
  %994 = vmatmul.mubr.f32.gmra.mxu0 %v925
  %v995 = vpop.f32.mrf.mxu0
  %v996 = vadd.f32 0.0, %v995
  %v997 = vpop.f32.mrf.mxu0
  %998 = vdwg.mxu0
  %999 = vmatprep.subr.mxu0 0.0
  %1000 = vmatpush1.msra.mxu0 %v78
  %1001 = vmatprep.subr.mxu0 0.0
  %1002 = vmatpush1.msra.mxu0 %v77
  %1003 = vmatprep.subr.mxu0 0.0
  %1004 = vmatpush1.msra.mxu0 %v76
  %1005 = vmatprep.subr.mxu0 0.0
  %1006 = vmatpush1.msra.mxu0 %v75
  %1007 = vmatprep.subr.mxu0 0.0
  %1008 = vmatpush1.msra.mxu0 %v74
  %1009 = vmatprep.subr.mxu0 0.0
  %1010 = vmatpush1.msra.mxu0 %v73
  %1011 = vmatprep.subr.mxu0 0.0
  %1012 = vmatpush1.msra.mxu0 %v72
  %1013 = vmatprep.subr.mxu0 0.0
  %1014 = vmatpush1.msra.mxu0 %v71
  %1015 = vmatprep.subr.mxu0 0.0
  %1016 = vmatpush1.msra.mxu0 %v70
  %1017 = vmatprep.subr.mxu0 0.0
  %1018 = vmatpush1.msra.mxu0 %v69
  %1019 = vmatprep.subr.mxu0 0.0
  %1020 = vmatpush1.msra.mxu0 %v68
  %1021 = vmatprep.subr.mxu0 0.0
  %1022 = vmatpush1.msra.mxu0 %v67
  %1023 = vmatprep.subr.mxu0 0.0
  %1024 = vmatpush1.msra.mxu0 %v66
  %1025 = vmatprep.subr.mxu0 0.0
  %1026 = vmatpush1.msra.mxu0 %v65
  %1027 = vmatprep.subr.mxu0 0.0
  %1028 = vmatpush1.msra.mxu0 %v64
  %1029 = vmatprep.subr.mxu0 0.0
  %1030 = vmatpush1.msra.mxu0 %v63
  %1031 = vmatprep.subr.mxu0 0.0
  %1032 = vmatpush2.msra.mxu0 %v94
  %1033 = vmatprep.subr.mxu0 0.0
  %1034 = vmatpush2.msra.mxu0 %v93
  %1035 = vmatprep.subr.mxu0 0.0
  %1036 = vmatpush2.msra.mxu0 %v92
  %1037 = vmatprep.subr.mxu0 0.0
  %1038 = vmatpush2.msra.mxu0 %v91
  %1039 = vmatprep.subr.mxu0 0.0
  %1040 = vmatpush2.msra.mxu0 %v90
  %1041 = vmatprep.subr.mxu0 0.0
  %1042 = vmatpush2.msra.mxu0 %v89
  %1043 = vmatprep.subr.mxu0 0.0
  %1044 = vmatpush2.msra.mxu0 %v88
  %1045 = vmatprep.subr.mxu0 0.0
  %1046 = vmatpush2.msra.mxu0 %v87
  %1047 = vmatprep.subr.mxu0 0.0
  %1048 = vmatpush2.msra.mxu0 %v86
  %1049 = vmatprep.subr.mxu0 0.0
  %1050 = vmatpush2.msra.mxu0 %v85
  %1051 = vmatprep.subr.mxu0 0.0
  %1052 = vmatpush2.msra.mxu0 %v84
  %1053 = vmatprep.subr.mxu0 0.0
  %1054 = vmatpush2.msra.mxu0 %v83
  %1055 = vmatprep.subr.mxu0 0.0
  %1056 = vmatpush2.msra.mxu0 %v82
  %1057 = vmatprep.subr.mxu0 0.0
  %1058 = vmatpush2.msra.mxu0 %v81
  %1059 = vmatprep.subr.mxu0 0.0
  %1060 = vmatpush2.msra.mxu0 %v80
  %1061 = vmatprep.subr.mxu0 0.0
  %1062 = vmatpush2.msra.mxu0 %v79
  %1063 = vmatprep.mubr.f32.mxu0 %v928
  %1064 = vmatmul.mubr.f32.gmra.mxu0 %v927
  %v1065 = vpop.f32.mrf.mxu0
  %v1066 = vadd.f32 %v996, %v1065
  %v1067 = vpop.f32.mrf.mxu0
  %1068 = vdwg.mxu0
  %1069 = vst [vmem:[%s6] sm:$0xff] %v1066
  // Predicated region
  $region26: #{residual_block_forward.1} parent=0 // pred_check
    _
  $region27: #{residual_block_forward.1} parent=0 // pred_check_branch
    %1071 = sbr.rel (0) target = $region29
  $region28: #{residual_block_forward.1} parent=0 // pred_region
    _
  $region29: #{residual_block_forward.1} parent=0 // pred_fallthru
    _
  // Predicated region
  $region30: #{residual_block_forward.1} parent=0 // pred_check
    _
  $region31: #{residual_block_forward.1} parent=0 // pred_check_branch
    %1073 = sbr.rel (0) target = $region33
  $region32: #{residual_block_forward.1} parent=0 // pred_region
    _
  $region33: #{residual_block_forward.1} parent=0 // pred_fallthru
    _

</llo_original>
